<compile_context>
chip_gen: v7x
topology: tpu7x:2x2x1
jax: 0.10.0
libtpu: 0.0.40
codegen_flags: <defaults>
</compile_context>

<pallas_src>
import math

import jax
import jax.numpy as jnp
from jax.experimental import pallas as pl
from jax.experimental.pallas import tpu as pltpu


def _round_up(x, m):
    return (x + m - 1) // m * m


def decoder_kernel(x_ref, w1_ref, w2_ref, b1_ref, b2_ref, c1_ref, c2_ref):
    # x_ref : (tile_b, Kp)        w1_ref/w2_ref : (Kp, tile_n)
    # b1_ref/b2_ref : (1, tile_n) c1_ref/c2_ref : (tile_b, tile_n)
    x = x_ref[...].astype(w1_ref.dtype)  # in-kernel cast (no extra wrapper pass)
    y1 = jnp.dot(x, w1_ref[...], preferred_element_type=jnp.float32) + b1_ref[...]
    c1_ref[...] = jnp.maximum(y1, 0.0).astype(c1_ref.dtype)
    y2 = jnp.dot(x, w2_ref[...], preferred_element_type=jnp.float32) + b2_ref[...]
    c2_ref[...] = jnp.maximum(y2, 0.0).astype(c2_ref.dtype)


def prepare_decoder_params(weight, bias, hidden, *, tile_n=None,
                           compute_dtype=jnp.bfloat16,
                           weight_vmem_budget_bytes=28 * 1024 * 1024):
    """One-time parameter prep (hoisted out of the forward path).

    weight: (2H, H) in PyTorch nn.Linear layout; bias: (2H,).
    Splits into two H-wide halves, transposes to (K, N), pads K only to the
    sublane requirement (8 f32 / 16 bf16) and N to a multiple of tile_n, and
    casts weights to compute_dtype (default bf16; pass None for full f32).
    """
    H = hidden
    assert weight.shape == (2 * H, H) and bias.shape == (2 * H,)

    w_dtype = compute_dtype if compute_dtype is not None else weight.dtype
    w_bytes = jnp.dtype(w_dtype).itemsize
    sub_k = 16 if w_bytes < 4 else 8          # sublane packing for W's K dim
    k_pad = _round_up(H, sub_k)

    if tile_n is None:
        # Largest multiple of 128 such that the double-buffered W1+W2 blocks
        # fit the VMEM budget (keeps v7x/v5e safe for large H).
        cap = weight_vmem_budget_bytes // (4 * k_pad * w_bytes)
        cap = max(128, (cap // 128) * 128)
        tile_n = min(_round_up(H, 128), cap)
    assert tile_n % 128 == 0
    n_pad = _round_up(H, tile_n)              # per-half output width (padded)

    def prep_half(w_half, b_half):
        w_t = w_half.T                        # (H, H): one-time copy
        w_t = jnp.pad(w_t, ((0, k_pad - H), (0, n_pad - H)))
        w_t = w_t.astype(w_dtype)
        b = jnp.pad(b_half, (0, n_pad - H)).reshape(1, n_pad).astype(jnp.float32)
        return w_t, b

    w1, b1 = prep_half(weight[:H], bias[:H])
    w2, b2 = prep_half(weight[H:], bias[H:])
    return dict(w1=w1, w2=w2, b1=b1, b2=b2, hidden=H,
                k_pad=k_pad, n_pad=n_pad, tile_n=tile_n,
                compute_dtype=compute_dtype)


def decoder_forward(params, word_embedding, *, tile_b=None, out_dtype=None,
                    vmem_limit_bytes=None):
    """word_embedding: (B, H). Returns (cluster1, cluster2), each (B, H)."""
    B, H = word_embedding.shape
    assert H == params["hidden"]
    k_pad, n_pad, tile_n = params["k_pad"], params["n_pad"], params["tile_n"]
    if out_dtype is None:
        out_dtype = word_embedding.dtype

    # Sublane multiple for the batch dim: 16 if any bf16 array is involved.
    any_bf16 = (params["compute_dtype"] == jnp.bfloat16
                or word_embedding.dtype == jnp.bfloat16
                or out_dtype == jnp.bfloat16)
    sub_b = 16 if any_bf16 else 8

    if tile_b is None:
        # Largest sublane-aligned batch tile up to 256 (full MXU height on
        # v6e/v7x); no artificial splitting of small batches.
        tile_b = min(_round_up(B, sub_b), 256)
    assert tile_b % sub_b == 0
    b_pad = _round_up(B, tile_b)

    x = word_embedding
    if (b_pad, k_pad) != (B, H):
        x = jnp.pad(x, ((0, b_pad - B), (0, k_pad - H)))

    # Weight-column axis OUTER, batch axis INNER: weight blocks keep the same
    # block index across consecutive inner steps -> DMA'd once per column.
    grid = (n_pad // tile_n, b_pad // tile_b)

    # Estimate the double-buffered VMEM resident set and request it explicitly.
    w_bytes = jnp.dtype(params["w1"].dtype).itemsize
    x_bytes = jnp.dtype(x.dtype).itemsize
    o_bytes = jnp.dtype(out_dtype).itemsize
    est = (2 * 2 * k_pad * tile_n * w_bytes          # W1 + W2, double-buffered
           + 2 * tile_b * k_pad * x_bytes            # x, double-buffered
           + 2 * 2 * tile_b * tile_n * o_bytes       # two outputs, double-buffered
           + 2 * 2 * tile_n * 4)                     # biases
    if vmem_limit_bytes is None:
        vmem_limit_bytes = min(max(int(est * 1.5), 16 * 1024 * 1024),
                               60 * 1024 * 1024)

    out_shape = (
        jax.ShapeDtypeStruct((b_pad, n_pad), out_dtype),
        jax.ShapeDtypeStruct((b_pad, n_pad), out_dtype),
    )

    c1, c2 = pl.pallas_call(
        decoder_kernel,
        out_shape=out_shape,
        grid_spec=pltpu.PrefetchScalarGridSpec(
            num_scalar_prefetch=0,
            grid=grid,
            in_specs=[
                pl.BlockSpec((tile_b, k_pad), lambda j, i: (i, 0)),   # x tile
                pl.BlockSpec((k_pad, tile_n), lambda j, i: (0, j)),   # W1 column block
                pl.BlockSpec((k_pad, tile_n), lambda j, i: (0, j)),   # W2 column block
                pl.BlockSpec((1, tile_n), lambda j, i: (0, j)),       # b1 block
                pl.BlockSpec((1, tile_n), lambda j, i: (0, j)),       # b2 block
            ],
            out_specs=[
                pl.BlockSpec((tile_b, tile_n), lambda j, i: (i, j)),  # cluster1
                pl.BlockSpec((tile_b, tile_n), lambda j, i: (i, j)),  # cluster2
            ],
        ),
        compiler_params=pltpu.CompilerParams(
            dimension_semantics=("parallel", "parallel"),
            vmem_limit_bytes=vmem_limit_bytes),
    )(x, params["w1"], params["w2"], params["b1"], params["b2"])

    if (b_pad, n_pad) != (B, H):
        c1 = c1[:B, :H]
        c2 = c2[:B, :H]
    return c1, c2


if __name__ == "__main__":
    # Shapes consistent with the module: hidden_size = 300, small batch.
    # With the new defaults this runs as a single grid step: grid = (1, 1),
    # k_pad = 304 (not 384), tile_n = n_pad = 384, tile_b = b_pad = 32.
    batch = 32
    hidden = 300

    key = jax.random.PRNGKey(0)
    kx, kw, kb = jax.random.split(key, 3)

    bound = 1.0 / math.sqrt(hidden)
    weight = jax.random.uniform(kw, (2 * hidden, hidden), jnp.float32, -bound, bound)
    bias = jax.random.uniform(kb, (2 * hidden,), jnp.float32, -bound, bound)
    word_embedding = jax.random.normal(kx, (batch, hidden), jnp.float32)

    # Reference (plain JAX)
    ref = jnp.maximum(word_embedding @ weight.T + bias, 0.0)
    ref1, ref2 = ref[:, :hidden], ref[:, hidden:]

    # Default path: bf16 weights (halves weight HBM traffic), f32 accumulation.
    params = prepare_decoder_params(weight, bias, hidden)
    cluster1, cluster2 = decoder_forward(params, word_embedding)
    jax.block_until_ready((cluster1, cluster2))
    assert cluster1.shape == (batch, hidden) and cluster2.shape == (batch, hidden)
    assert jnp.allclose(cluster1, ref1, atol=5e-2, rtol=5e-2)
    assert jnp.allclose(cluster2, ref2, atol=5e-2, rtol=5e-2)

    # Full-f32 path for tight numerical verification.
    params_f32 = prepare_decoder_params(weight, bias, hidden, compute_dtype=None)
    c1f, c2f = decoder_forward(params_f32, word_embedding)
    jax.block_until_ready((c1f, c2f))
    assert jnp.allclose(c1f, ref1, atol=1e-4, rtol=1e-4)
    assert jnp.allclose(c2f, ref2, atol=1e-4, rtol=1e-4)

    print("KERNEL_OK")
</pallas_src>

<mosaic_0001>
module attributes {stable_mosaic.version = 11 : i64} {
  func.func @decoder_kernel(%arg0: i32, %arg1: i32, %arg2: memref<32x304xf32, #tpu.memory_space<vmem>>, %arg3: memref<304x384xbf16, #tpu.memory_space<vmem>>, %arg4: memref<304x384xbf16, #tpu.memory_space<vmem>>, %arg5: memref<1x384xf32, #tpu.memory_space<vmem>>, %arg6: memref<1x384xf32, #tpu.memory_space<vmem>>, %arg7: memref<32x384xf32, #tpu.memory_space<vmem>>, %arg8: memref<32x384xf32, #tpu.memory_space<vmem>>) attributes {dimension_semantics = [#tpu.dimension_semantics<parallel>, #tpu.dimension_semantics<parallel>], iteration_bounds = array<i64: 1, 1>, scalar_prefetch = 0 : i64, scratch_operands = 0 : i64, tpu.core_type = #tpu.core_type<tc>, window_params = [{transform_indices = @transform_0, window_bounds = array<i64: 32, 304>}, {transform_indices = @transform_1, window_bounds = array<i64: 304, 384>}, {transform_indices = @transform_2, window_bounds = array<i64: 304, 384>}, {transform_indices = @transform_3, window_bounds = array<i64: 1, 384>}, {transform_indices = @transform_4, window_bounds = array<i64: 1, 384>}, {transform_indices = @transform_5, window_bounds = array<i64: 32, 384>}, {transform_indices = @transform_6, window_bounds = array<i64: 32, 384>}]} {
    %c0 = arith.constant 0 : index
    %c0_0 = arith.constant 0 : index
    %0 = vector.load %arg2[%c0, %c0_0] : memref<32x304xf32, #tpu.memory_space<vmem>>, vector<32x304xf32>
    %1 = arith.truncf %0 : vector<32x304xf32> to vector<32x304xbf16>
    %c0_1 = arith.constant 0 : index
    %c0_2 = arith.constant 0 : index
    %2 = vector.load %arg3[%c0_1, %c0_2] : memref<304x384xbf16, #tpu.memory_space<vmem>>, vector<304x384xbf16>
    %cst = arith.constant dense<0.000000e+00> : vector<32x384xf32>
    %3 = tpu.matmul %1, %2, %cst {dimension_numbers = #tpu.dot_dimension_numbers<[1], [0], [0], [1], [0, 0, 1, 1], [], []>} : vector<32x304xbf16>, vector<304x384xbf16>, vector<32x384xf32> -> vector<32x384xf32>
    %c0_3 = arith.constant 0 : index
    %c0_4 = arith.constant 0 : index
    %4 = vector.load %arg5[%c0_3, %c0_4] : memref<1x384xf32, #tpu.memory_space<vmem>>, vector<1x384xf32>
    %5 = vector.broadcast %4 : vector<1x384xf32> to vector<32x384xf32>
    %6 = arith.addf %3, %5 : vector<32x384xf32>
    %cst_5 = arith.constant 0.000000e+00 : f32
    %7 = vector.broadcast %cst_5 : f32 to vector<32x384xf32>
    %8 = arith.maximumf %6, %7 : vector<32x384xf32>
    %c0_6 = arith.constant 0 : index
    %c0_7 = arith.constant 0 : index
    %9 = vector.load %arg7[%c0_6, %c0_7] : memref<32x384xf32, #tpu.memory_space<vmem>>, vector<32x384xf32>
    tpu.vector_store %arg7[%c0_6, %c0_7], %8 {strides = array<i32>} : memref<32x384xf32, #tpu.memory_space<vmem>>, vector<32x384xf32>,
    %c0_8 = arith.constant 0 : index
    %c0_9 = arith.constant 0 : index
    %10 = vector.load %arg4[%c0_8, %c0_9] : memref<304x384xbf16, #tpu.memory_space<vmem>>, vector<304x384xbf16>
    %cst_10 = arith.constant dense<0.000000e+00> : vector<32x384xf32>
    %11 = tpu.matmul %1, %10, %cst_10 {dimension_numbers = #tpu.dot_dimension_numbers<[1], [0], [0], [1], [0, 0, 1, 1], [], []>} : vector<32x304xbf16>, vector<304x384xbf16>, vector<32x384xf32> -> vector<32x384xf32>
    %c0_11 = arith.constant 0 : index
    %c0_12 = arith.constant 0 : index
    %12 = vector.load %arg6[%c0_11, %c0_12] : memref<1x384xf32, #tpu.memory_space<vmem>>, vector<1x384xf32>
    %13 = vector.broadcast %12 : vector<1x384xf32> to vector<32x384xf32>
    %14 = arith.addf %11, %13 : vector<32x384xf32>
    %cst_13 = arith.constant 0.000000e+00 : f32
    %15 = vector.broadcast %cst_13 : f32 to vector<32x384xf32>
    %16 = arith.maximumf %14, %15 : vector<32x384xf32>
    %c0_14 = arith.constant 0 : index
    %c0_15 = arith.constant 0 : index
    %17 = vector.load %arg8[%c0_14, %c0_15] : memref<32x384xf32, #tpu.memory_space<vmem>>, vector<32x384xf32>
    tpu.vector_store %arg8[%c0_14, %c0_15], %16 {strides = array<i32>} : memref<32x384xf32, #tpu.memory_space<vmem>>, vector<32x384xf32>,
    return
  }
  func.func @transform_0(%arg0: i32, %arg1: i32) -> (i32, i32) {
    %c0_i32 = arith.constant 0 : i32
    %c0_i32_0 = arith.constant 0 : i32
    return %arg1, %c0_i32 : i32, i32
  }
  func.func @transform_1(%arg0: i32, %arg1: i32) -> (i32, i32) {
    %c0_i32 = arith.constant 0 : i32
    %c0_i32_0 = arith.constant 0 : i32
    return %c0_i32, %arg0 : i32, i32
  }
  func.func @transform_2(%arg0: i32, %arg1: i32) -> (i32, i32) {
    %c0_i32 = arith.constant 0 : i32
    %c0_i32_0 = arith.constant 0 : i32
    return %c0_i32, %arg0 : i32, i32
  }
  func.func @transform_3(%arg0: i32, %arg1: i32) -> (i32, i32) {
    %c0_i32 = arith.constant 0 : i32
    %c0_i32_0 = arith.constant 0 : i32
    return %c0_i32, %arg0 : i32, i32
  }
  func.func @transform_4(%arg0: i32, %arg1: i32) -> (i32, i32) {
    %c0_i32 = arith.constant 0 : i32
    %c0_i32_0 = arith.constant 0 : i32
    return %c0_i32, %arg0 : i32, i32
  }
  func.func @transform_5(%arg0: i32, %arg1: i32) -> (i32, i32) {
    %c0_i32 = arith.constant 0 : i32
    return %arg1, %arg0 : i32, i32
  }
  func.func @transform_6(%arg0: i32, %arg1: i32) -> (i32, i32) {
    %c0_i32 = arith.constant 0 : i32
    return %arg1, %arg0 : i32, i32
  }
}

</mosaic_0001>

<llo_original>
// kernel: tpu_custom_call.1
$region0: #{tpu_custom_call.1}
  #allocation0 [shape = 'u32[]', space=smem, size = 0x4, offset = 0x4, fixed_abs, tag = 'smem constant byte address 0x4 - core index']
  #allocation1 [shape = 'u32[144,128]{1,0:T(1,128)}', space=vmem, size = 0x12000, scoped, tag = 'internal scratch']
  %s0 = inlined_call_operand.hbm [shape: f32[32,304], index: 0, kind: input, shape index: {}]
  %s1 = inlined_call_operand.hbm [shape: bf16[304,384], index: 1, kind: input, shape index: {}]
  %s2 = inlined_call_operand.hbm [shape: bf16[304,384], index: 2, kind: input, shape index: {}]
  %s3 = inlined_call_operand.vmem [shape: f32[1,384], index: 3, kind: input, shape index: {}]
  %s4 = inlined_call_operand.vmem [shape: f32[1,384], index: 4, kind: input, shape index: {}]
  %s5 = inlined_call_operand.hbm [shape: f32[32,384], index: 5, kind: output, shape index: {0}]
  %s6 = inlined_call_operand.hbm [shape: f32[32,384], index: 6, kind: output, shape index: {1}]
  %7 = xla_tuple %s5, %s6
  %s8 = sld [smem:[#allocation0]]
  $region50: #{tpu_custom_call.1} parent=0
    _
  %s10 = ssub.s32 1, %s8
  %s11 = scalar_select 0, %s10, %s8
  $region1: #{tpu_custom_call.1} parent=0
    #allocation2 [shape = 'u8[49152]{0}', space=vmem, size = 0xc000, scoped, tag = 'input window, operand 0, single buffered']
    #allocation3 [shape = 's32[1]{0}', space=sflag, size = 0x4, scoped, tag = 'scoped memory for tpu_custom_call.1']
    #allocation4 [shape = 's32[1]{0}', space=sflag, size = 0x4, scoped, tag = 'scoped memory for tpu_custom_call.1']
    #allocation5 [shape = 'u8[233472]{0}', space=vmem, size = 0x39000, scoped, tag = 'input window, operand 1, single buffered']
    #allocation6 [shape = 's32[1]{0}', space=sflag, size = 0x4, scoped, tag = 'scoped memory for tpu_custom_call.1']
    #allocation7 [shape = 'u8[233472]{0}', space=vmem, size = 0x39000, scoped, tag = 'input window, operand 2, single buffered']
    #allocation8 [shape = 'u8[49152]{0}', space=vmem, size = 0xc000, scoped, tag = 'output window, operand 0, single buffered']
    #allocation9 [shape = 'u8[49152]{0}', space=vmem, size = 0xc000, scoped, tag = 'output window, operand 1, single buffered']
    #allocation10 [shape = 's32[1]{0}', space=sflag, size = 0x4, scoped, tag = 'scoped memory for tpu_custom_call.1']
    %12 = vsyncpa [#allocation3], 0
    %13 = vsyncpa [#allocation6], 0
    %14 = vsyncpa [#allocation4], 0
    %15 = vsyncpa [#allocation10], 0
    // Predicated region
    $region2: #{tpu_custom_call.1} parent=1 // pred_check
      _
    $region3: #{tpu_custom_call.1} parent=1 // pred_check_branch
      %17 = sbr.rel (0) target = $region5
    $region4: #{tpu_custom_call.1} parent=1 // pred_region
      %s19 = ssub.s32 1536, 1536
      %20 = vsyncadd [#allocation3], %s19
      %s21 = sshll.u32 [#allocation2], 4
      %s22 = int_to_ptr.vmem [resolvable:$true] %s21
      %27 = dma.hbm_to_vmem [thread:$0]  %s0, 1536, %s22, [#allocation3], 384, 384, 24
    $region5: #{tpu_custom_call.1} parent=1 // pred_fallthru
      _
    // Predicated region
    $region6: #{tpu_custom_call.1} parent=1 // pred_check
      _
    $region7: #{tpu_custom_call.1} parent=1 // pred_check_branch
      %29 = sbr.rel (0) target = $region9
    $region8: #{tpu_custom_call.1} parent=1 // pred_region
      %s31 = ssub.s32 7296, 7296
      %32 = vsyncadd [#allocation6], %s31
      %s33 = sshll.u32 [#allocation5], 4
      %s34 = int_to_ptr.vmem [resolvable:$true] %s33
      %39 = dma.hbm_to_vmem [thread:$0]  %s1, 7296, %s34, [#allocation6], 192, 192, 12
    $region9: #{tpu_custom_call.1} parent=1 // pred_fallthru
      _
    // Predicated region
    $region10: #{tpu_custom_call.1} parent=1 // pred_check
      _
    $region11: #{tpu_custom_call.1} parent=1 // pred_check_branch
      %41 = sbr.rel (0) target = $region13
    $region12: #{tpu_custom_call.1} parent=1 // pred_region
      %s43 = ssub.s32 7296, 7296
      %44 = vsyncadd [#allocation6], %s43
      %s45 = sshll.u32 [#allocation7], 4
      %s46 = int_to_ptr.vmem [resolvable:$true] %s45
      %51 = dma.hbm_to_vmem [thread:$0]  %s2, 7296, %s46, [#allocation6], 192, 192, 12
    $region13: #{tpu_custom_call.1} parent=1 // pred_fallthru
      _
    // Predicated region
    $region14: #{tpu_custom_call.1} parent=1 // pred_check
      _
    $region15: #{tpu_custom_call.1} parent=1 // pred_check_branch
      %53 = sbr.rel (0) target = $region17
    $region16: #{tpu_custom_call.1} parent=1 // pred_region
      _
    $region17: #{tpu_custom_call.1} parent=1 // pred_fallthru
      _
    // Predicated region
    $region18: #{tpu_custom_call.1} parent=1 // pred_check
      _
    $region19: #{tpu_custom_call.1} parent=1 // pred_check_branch
      %55 = sbr.rel (0) target = $region21
    $region20: #{tpu_custom_call.1} parent=1 // pred_region
      _
    $region21: #{tpu_custom_call.1} parent=1 // pred_fallthru
      _
    // Predicated region
    $region22: #{tpu_custom_call.1} parent=1 // pred_check
      _
    $region23: #{tpu_custom_call.1} parent=1 // pred_check_branch
      %57 = sbr.rel (0) target = $region25
    $region24: #{tpu_custom_call.1} parent=1 // pred_region
      %58 = dma.done [#allocation3], 1536
    $region25: #{tpu_custom_call.1} parent=1 // pred_fallthru
      _
    // Predicated region
    $region26: #{tpu_custom_call.1} parent=1 // pred_check
      _
    $region27: #{tpu_custom_call.1} parent=1 // pred_check_branch
      %60 = sbr.rel (0) target = $region29
    $region28: #{tpu_custom_call.1} parent=1 // pred_region
      %61 = dma.done [#allocation6], 7296
    $region29: #{tpu_custom_call.1} parent=1 // pred_fallthru
      _
    // Predicated region
    $region30: #{tpu_custom_call.1} parent=1 // pred_check
      _
    $region31: #{tpu_custom_call.1} parent=1 // pred_check_branch
      %63 = sbr.rel (0) target = $region33
    $region32: #{tpu_custom_call.1} parent=1 // pred_region
      %64 = dma.done [#allocation6], 7296
    $region33: #{tpu_custom_call.1} parent=1 // pred_fallthru
      _
    %v66 = vld [vmem:[#allocation2] sm:$0xff]
    %v67 = vld [vmem:[#allocation2 + $0x8] sm:$0xff]
    %v68 = vld [vmem:[#allocation2 + $0x10] sm:$0xff]
    %v69 = vld [vmem:[#allocation2 + $0x18] sm:$0xff]
    %v70 = vld [vmem:[#allocation2 + $0x20] sm:$0xff]
    %v71 = vld [vmem:[#allocation2 + $0x28] sm:$0xff]
    %v72 = vld [vmem:[#allocation2 + $0x30] sm:$0xff]
    %v73 = vld [vmem:[#allocation2 + $0x38] sm:$0xff]
    %v74 = vld [vmem:[#allocation2 + $0x40] sm:$0xff]
    %v75 = vld [vmem:[#allocation2 + $0x48] sm:$0xff]
    %v76 = vld [vmem:[#allocation2 + $0x50] sm:$0xff]
    %v77 = vld [vmem:[#allocation2 + $0x58] sm:$0xff]
    %v78 = vpack.c.bf16 %v69, %v66
    %v79 = vpack.c.bf16 %v70, %v67
    %v80 = vpack.c.bf16 %v71, %v68
    %v81 = vpack.c.bf16 %v75, %v72
    %v82 = vpack.c.bf16 %v76, %v73
    %v83 = vpack.c.bf16 %v77, %v74
    %v84 = vld [vmem:[#allocation5] sm:$0xff]
    %v85 = vld [vmem:[#allocation5 + $0x8] sm:$0xf]
    %v86 = vld [vmem:[#allocation5 + $0xc] sm:$0xff]
    %v87 = vld [vmem:[#allocation5 + $0x14] sm:$0xf]
    %v88 = vld [vmem:[#allocation5 + $0x18] sm:$0xff]
    %v89 = vld [vmem:[#allocation5 + $0x20] sm:$0xf]
    %v90 = vld [vmem:[#allocation5 + $0x24] sm:$0xff]
    %v91 = vld [vmem:[#allocation5 + $0x2c] sm:$0xf]
    %v92 = vld [vmem:[#allocation5 + $0x30] sm:$0xff]
    %v93 = vld [vmem:[#allocation5 + $0x38] sm:$0xf]
    %v94 = vld [vmem:[#allocation5 + $0x3c] sm:$0xff]
    %v95 = vld [vmem:[#allocation5 + $0x44] sm:$0xf]
    %v96 = vld [vmem:[#allocation5 + $0x48] sm:$0xff]
    %v97 = vld [vmem:[#allocation5 + $0x50] sm:$0xf]
    %v98 = vld [vmem:[#allocation5 + $0x54] sm:$0xff]
    %v99 = vld [vmem:[#allocation5 + $0x5c] sm:$0xf]
    %v100 = vld [vmem:[#allocation5 + $0x60] sm:$0xff]
    %v101 = vld [vmem:[#allocation5 + $0x68] sm:$0xf]
    %v102 = vld [vmem:[#allocation5 + $0x6c] sm:$0xff]
    %v103 = vld [vmem:[#allocation5 + $0x74] sm:$0xf]
    %v104 = vld [vmem:[#allocation5 + $0x78] sm:$0xff]
    %v105 = vld [vmem:[#allocation5 + $0x80] sm:$0xf]
    %v106 = vld [vmem:[#allocation5 + $0x84] sm:$0xff]
    %v107 = vld [vmem:[#allocation5 + $0x8c] sm:$0xf]
    %v108 = vld [vmem:[#allocation5 + $0x90] sm:$0xff]
    %v109 = vld [vmem:[#allocation5 + $0x98] sm:$0xf]
    %v110 = vld [vmem:[#allocation5 + $0x9c] sm:$0xff]
    %v111 = vld [vmem:[#allocation5 + $0xa4] sm:$0xf]
    %v112 = vld [vmem:[#allocation5 + $0xa8] sm:$0xff]
    %v113 = vld [vmem:[#allocation5 + $0xb0] sm:$0xf]
    %v114 = vld [vmem:[#allocation5 + $0xb4] sm:$0xff]
    %v115 = vld [vmem:[#allocation5 + $0xbc] sm:$0xf]
    %v116 = vld [vmem:[#allocation5 + $0xc0] sm:$0xff]
    %v117 = vld [vmem:[#allocation5 + $0xc8] sm:$0xf]
    %v118 = vld [vmem:[#allocation5 + $0xcc] sm:$0xff]
    %v119 = vld [vmem:[#allocation5 + $0xd4] sm:$0xf]
    %v120 = vld [vmem:[#allocation5 + $0xd8] sm:$0xff]
    %v121 = vld [vmem:[#allocation5 + $0xe0] sm:$0xf]
    %v122 = vld [vmem:[#allocation5 + $0xe4] sm:$0xff]
    %v123 = vld [vmem:[#allocation5 + $0xec] sm:$0xf]
    %v124 = vld [vmem:[#allocation5 + $0xf0] sm:$0xff]
    %v125 = vld [vmem:[#allocation5 + $0xf8] sm:$0xf]
    %v126 = vld [vmem:[#allocation5 + $0xfc] sm:$0xff]
    %v127 = vld [vmem:[#allocation5 + $0x104] sm:$0xf]
    %v128 = vld [vmem:[#allocation5 + $0x108] sm:$0xff]
    %v129 = vld [vmem:[#allocation5 + $0x110] sm:$0xf]
    %v130 = vld [vmem:[#allocation5 + $0x114] sm:$0xff]
    %v131 = vld [vmem:[#allocation5 + $0x11c] sm:$0xf]
    %v132 = vld [vmem:[#allocation5 + $0x120] sm:$0xff]
    %v133 = vld [vmem:[#allocation5 + $0x128] sm:$0xf]
    %v134 = vld [vmem:[#allocation5 + $0x12c] sm:$0xff]
    %v135 = vld [vmem:[#allocation5 + $0x134] sm:$0xf]
    %v136 = vld [vmem:[#allocation5 + $0x138] sm:$0xff]
    %v137 = vld [vmem:[#allocation5 + $0x140] sm:$0xf]
    %v138 = vld [vmem:[#allocation5 + $0x144] sm:$0xff]
    %v139 = vld [vmem:[#allocation5 + $0x14c] sm:$0xf]
    %v140 = vld [vmem:[#allocation5 + $0x150] sm:$0xff]
    %v141 = vld [vmem:[#allocation5 + $0x158] sm:$0xf]
    %v142 = vld [vmem:[#allocation5 + $0x15c] sm:$0xff]
    %v143 = vld [vmem:[#allocation5 + $0x164] sm:$0xf]
    %v144 = vld [vmem:[#allocation5 + $0x168] sm:$0xff]
    %v145 = vld [vmem:[#allocation5 + $0x170] sm:$0xf]
    %v146 = vld [vmem:[#allocation5 + $0x174] sm:$0xff]
    %v147 = vld [vmem:[#allocation5 + $0x17c] sm:$0xf]
    %v148 = vld [vmem:[#allocation5 + $0x180] sm:$0xff]
    %v149 = vld [vmem:[#allocation5 + $0x188] sm:$0xf]
    %v150 = vld [vmem:[#allocation5 + $0x18c] sm:$0xff]
    %v151 = vld [vmem:[#allocation5 + $0x194] sm:$0xf]
    %v152 = vld [vmem:[#allocation5 + $0x198] sm:$0xff]
    %v153 = vld [vmem:[#allocation5 + $0x1a0] sm:$0xf]
    %v154 = vld [vmem:[#allocation5 + $0x1a4] sm:$0xff]
    %v155 = vld [vmem:[#allocation5 + $0x1ac] sm:$0xf]
    %v156 = vld [vmem:[#allocation5 + $0x1b0] sm:$0xff]
    %v157 = vld [vmem:[#allocation5 + $0x1b8] sm:$0xf]
    %v158 = vld [vmem:[#allocation5 + $0x1bc] sm:$0xff]
    %v159 = vld [vmem:[#allocation5 + $0x1c4] sm:$0xf]
    %v160 = vld [vmem:[%s3] sm:$0x7]
    %v162 = vlaneseq
    %v163 = vshrl.u32 %v162, 7
    %v164 = vsub.s32 0, %v163
    %v165 = vrot.slane %v160, %v164
    %v166 = vlaneseq
    %v167 = vshrl.u32 %v166, 7
    %v168 = vsub.s32 1, %v167
    %v169 = vrot.slane %v160, %v168
    %v170 = vlaneseq
    %v171 = vshrl.u32 %v170, 7
    %v172 = vsub.s32 2, %v171
    %v173 = vrot.slane %v160, %v172
    %v253 = vunpack.c.l.b16 %v84
    %v254 = vunpack.c.h.b16 %v84
    %v255 = vunpack.c.l.b16 %v85
    %v256 = vunpack.c.l.b16 %v86
    %v257 = vunpack.c.h.b16 %v86
    %v258 = vunpack.c.l.b16 %v87
    %v259 = vunpack.c.l.b16 %v88
    %v260 = vunpack.c.h.b16 %v88
    %v261 = vunpack.c.l.b16 %v89
    %v262 = vunpack.c.l.b16 %v90
    %v263 = vunpack.c.h.b16 %v90
    %v264 = vunpack.c.l.b16 %v91
    %v265 = vunpack.c.l.b16 %v92
    %v266 = vunpack.c.h.b16 %v92
    %v267 = vunpack.c.l.b16 %v93
    %v268 = vunpack.c.l.b16 %v94
    %v269 = vunpack.c.h.b16 %v94
    %v270 = vunpack.c.l.b16 %v95
    %v271 = vunpack.c.l.b16 %v96
    %v272 = vunpack.c.h.b16 %v96
    %v273 = vunpack.c.l.b16 %v97
    %v274 = vunpack.c.l.b16 %v98
    %v275 = vunpack.c.h.b16 %v98
    %v276 = vunpack.c.l.b16 %v99
    %v277 = vunpack.c.l.b16 %v100
    %v278 = vunpack.c.h.b16 %v100
    %v279 = vunpack.c.l.b16 %v101
    %v280 = vunpack.c.l.b16 %v102
    %v281 = vunpack.c.h.b16 %v102
    %v282 = vunpack.c.l.b16 %v103
    %v283 = vunpack.c.l.b16 %v104
    %v284 = vunpack.c.h.b16 %v104
    %v285 = vunpack.c.l.b16 %v105
    %v286 = vunpack.c.l.b16 %v106
    %v287 = vunpack.c.h.b16 %v106
    %v288 = vunpack.c.l.b16 %v107
    %v289 = vunpack.c.l.b16 %v108
    %v290 = vunpack.c.h.b16 %v108
    %v291 = vunpack.c.l.b16 %v109
    %v292 = vunpack.c.l.b16 %v110
    %v293 = vunpack.c.h.b16 %v110
    %v294 = vunpack.c.l.b16 %v111
    %v295 = vunpack.c.l.b16 %v112
    %v296 = vunpack.c.h.b16 %v112
    %v297 = vunpack.c.l.b16 %v113
    %v298 = vunpack.c.l.b16 %v114
    %v299 = vunpack.c.h.b16 %v114
    %v300 = vunpack.c.l.b16 %v115
    %v301 = vunpack.c.l.b16 %v116
    %v302 = vunpack.c.h.b16 %v116
    %v303 = vunpack.c.l.b16 %v117
    %v304 = vunpack.c.l.b16 %v118
    %v305 = vunpack.c.h.b16 %v118
    %v306 = vunpack.c.l.b16 %v119
    %v307 = vunpack.c.l.b16 %v120
    %v308 = vunpack.c.h.b16 %v120
    %v309 = vunpack.c.l.b16 %v121
    %v310 = vunpack.c.l.b16 %v122
    %v311 = vunpack.c.h.b16 %v122
    %v312 = vunpack.c.l.b16 %v123
    %v313 = vunpack.c.l.b16 %v124
    %v314 = vunpack.c.h.b16 %v124
    %v315 = vunpack.c.l.b16 %v125
    %v316 = vunpack.c.l.b16 %v126
    %v317 = vunpack.c.h.b16 %v126
    %v318 = vunpack.c.l.b16 %v127
    %v319 = vunpack.c.l.b16 %v128
    %v320 = vunpack.c.h.b16 %v128
    %v321 = vunpack.c.l.b16 %v129
    %v322 = vunpack.c.l.b16 %v130
    %v323 = vunpack.c.h.b16 %v130
    %v324 = vunpack.c.l.b16 %v131
    %v325 = vunpack.c.l.b16 %v132
    %v326 = vunpack.c.h.b16 %v132
    %v327 = vunpack.c.l.b16 %v133
    %v328 = vunpack.c.l.b16 %v134
    %v329 = vunpack.c.h.b16 %v134
    %v330 = vunpack.c.l.b16 %v135
    %v331 = vunpack.c.l.b16 %v136
    %v332 = vunpack.c.h.b16 %v136
    %v333 = vunpack.c.l.b16 %v137
    %v334 = vunpack.c.l.b16 %v138
    %v335 = vunpack.c.h.b16 %v138
    %v336 = vunpack.c.l.b16 %v139
    %v337 = vunpack.c.l.b16 %v140
    %v338 = vunpack.c.h.b16 %v140
    %v339 = vunpack.c.l.b16 %v141
    %v340 = vunpack.c.l.b16 %v142
    %v341 = vunpack.c.h.b16 %v142
    %v342 = vunpack.c.l.b16 %v143
    %v343 = vunpack.c.l.b16 %v144
    %v344 = vunpack.c.h.b16 %v144
    %v345 = vunpack.c.l.b16 %v145
    %v346 = vunpack.c.l.b16 %v146
    %v347 = vunpack.c.h.b16 %v146
    %v348 = vunpack.c.l.b16 %v147
    %v349 = vunpack.c.l.b16 %v148
    %v350 = vunpack.c.h.b16 %v148
    %v351 = vunpack.c.l.b16 %v149
    %v352 = vunpack.c.l.b16 %v150
    %v353 = vunpack.c.h.b16 %v150
    %v354 = vunpack.c.l.b16 %v151
    %v355 = vunpack.c.l.b16 %v152
    %v356 = vunpack.c.h.b16 %v152
    %v357 = vunpack.c.l.b16 %v153
    %v358 = vunpack.c.l.b16 %v154
    %v359 = vunpack.c.h.b16 %v154
    %v360 = vunpack.c.l.b16 %v155
    %v361 = vunpack.c.l.b16 %v156
    %v362 = vunpack.c.h.b16 %v156
    %v363 = vunpack.c.l.b16 %v157
    %v364 = vunpack.c.l.b16 %v158
    %v365 = vunpack.c.h.b16 %v158
    %v366 = vunpack.c.l.b16 %v159
    %v367 = vpack.c.b16 %v256, %v253
    %v368 = vpack.c.b16 %v257, %v254
    %v369 = vpack.c.b16 %v258, %v255
    %v370 = vpack.c.b16 %v262, %v259
    %v371 = vpack.c.b16 %v263, %v260
    %v372 = vpack.c.b16 %v264, %v261
    %v373 = vpack.c.b16 %v268, %v265
    %v374 = vpack.c.b16 %v269, %v266
    %v375 = vpack.c.b16 %v270, %v267
    %v376 = vpack.c.b16 %v274, %v271
    %v377 = vpack.c.b16 %v275, %v272
    %v378 = vpack.c.b16 %v276, %v273
    %v379 = vpack.c.b16 %v280, %v277
    %v380 = vpack.c.b16 %v281, %v278
    %v381 = vpack.c.b16 %v282, %v279
    %v382 = vpack.c.b16 %v286, %v283
    %v383 = vpack.c.b16 %v287, %v284
    %v384 = vpack.c.b16 %v288, %v285
    %v385 = vpack.c.b16 %v292, %v289
    %v386 = vpack.c.b16 %v293, %v290
    %v387 = vpack.c.b16 %v294, %v291
    %v388 = vpack.c.b16 %v298, %v295
    %v389 = vpack.c.b16 %v299, %v296
    %v390 = vpack.c.b16 %v300, %v297
    %v391 = vpack.c.b16 %v304, %v301
    %v392 = vpack.c.b16 %v305, %v302
    %v393 = vpack.c.b16 %v306, %v303
    %v394 = vpack.c.b16 %v310, %v307
    %v395 = vpack.c.b16 %v311, %v308
    %v396 = vpack.c.b16 %v312, %v309
    %v397 = vpack.c.b16 %v316, %v313
    %v398 = vpack.c.b16 %v317, %v314
    %v399 = vpack.c.b16 %v318, %v315
    %v400 = vpack.c.b16 %v322, %v319
    %v401 = vpack.c.b16 %v323, %v320
    %v402 = vpack.c.b16 %v324, %v321
    %v403 = vpack.c.b16 %v328, %v325
    %v404 = vpack.c.b16 %v329, %v326
    %v405 = vpack.c.b16 %v330, %v327
    %v406 = vpack.c.b16 %v334, %v331
    %v407 = vpack.c.b16 %v335, %v332
    %v408 = vpack.c.b16 %v336, %v333
    %v409 = vpack.c.b16 %v340, %v337
    %v410 = vpack.c.b16 %v341, %v338
    %v411 = vpack.c.b16 %v342, %v339
    %v412 = vpack.c.b16 %v346, %v343
    %v413 = vpack.c.b16 %v347, %v344
    %v414 = vpack.c.b16 %v348, %v345
    %v415 = vpack.c.b16 %v352, %v349
    %v416 = vpack.c.b16 %v353, %v350
    %v417 = vpack.c.b16 %v354, %v351
    %v418 = vpack.c.b16 %v358, %v355
    %v419 = vpack.c.b16 %v359, %v356
    %v420 = vpack.c.b16 %v360, %v357
    %v421 = vpack.c.b16 %v364, %v361
    %v422 = vpack.c.b16 %v365, %v362
    %v423 = vpack.c.b16 %v366, %v363
    %vm481 = vcmask 392192
    %v483 = vsel %vm481, %v80, 0
    %v486 = vsel %vm481, %v83, 0
    %488 = vmatprep.subr.bf16.mxu0 %v368
    %489 = vmatpush1.bf16.msra.mxu0 %v367
    %490 = vmatprep.subr.bf16.mxu0 %v371
    %491 = vmatpush1.bf16.msra.mxu0 %v370
    %492 = vmatprep.subr.bf16.mxu0 %v374
    %493 = vmatpush1.bf16.msra.mxu0 %v373
    %494 = vmatprep.subr.bf16.mxu0 %v377
    %495 = vmatpush1.bf16.msra.mxu0 %v376
    %496 = vmatprep.subr.bf16.mxu0 %v380
    %497 = vmatpush1.bf16.msra.mxu0 %v379
    %498 = vmatprep.subr.bf16.mxu0 %v383
    %499 = vmatpush1.bf16.msra.mxu0 %v382
    %500 = vmatprep.subr.bf16.mxu0 %v386
    %501 = vmatpush1.bf16.msra.mxu0 %v385
    %502 = vmatprep.subr.bf16.mxu0 %v389
    %503 = vmatpush1.bf16.msra.mxu0 %v388
    %504 = vmatprep.subr.bf16.mxu0 %v392
    %505 = vmatpush1.bf16.msra.mxu0 %v391
    %506 = vmatprep.subr.bf16.mxu0 %v395
    %507 = vmatpush1.bf16.msra.mxu0 %v394
    %508 = vmatprep.subr.bf16.mxu0 %v398
    %509 = vmatpush1.bf16.msra.mxu0 %v397
    %510 = vmatprep.subr.bf16.mxu0 %v401
    %511 = vmatpush1.bf16.msra.mxu0 %v400
    %512 = vmatprep.subr.bf16.mxu0 %v404
    %513 = vmatpush1.bf16.msra.mxu0 %v403
    %514 = vmatprep.subr.bf16.mxu0 %v407
    %515 = vmatpush1.bf16.msra.mxu0 %v406
    %516 = vmatprep.subr.bf16.mxu0 %v410
    %517 = vmatpush1.bf16.msra.mxu0 %v409
    %518 = vmatprep.subr.bf16.mxu0 %v413
    %519 = vmatpush1.bf16.msra.mxu0 %v412
    %520 = vmatprep.mubr.bf16.mxu0 %v79
    %521 = vmatmul.mubr.bf16.gmra.mrb[0].mxu0 %v78
    %v522 = vpop.f32.mrb[0].mxu0
    %v523 = vadd.f32 %v165, %v522
    %v524 = vpop.f32.mrb[0].mxu0
    %v525 = vadd.f32 %v169, %v524
    %v526 = vpop.f32.mrb[0].mxu0
    %v527 = vadd.f32 %v165, %v526
    %v528 = vpop.f32.mrb[0].mxu0
    %v529 = vadd.f32 %v169, %v528
    %530 = vmatprep.mubr.bf16.mxu0 %v82
    %531 = vmatmul.mubr.bf16.gmra.mrb[0].mxu0 %v81
    %v532 = vpop.f32.mrb[0].mxu0
    %v533 = vadd.f32 %v165, %v532
    %v534 = vpop.f32.mrb[0].mxu0
    %v535 = vadd.f32 %v169, %v534
    %v536 = vpop.f32.mrb[0].mxu0
    %v537 = vadd.f32 %v165, %v536
    %v538 = vpop.f32.mrb[0].mxu0
    %v539 = vadd.f32 %v169, %v538
    %540 = vdwg.mxu0
    %541 = vmatprep.subr.bf16.mxu0 %v416
    %542 = vmatpush1.bf16.msra.mxu0 %v415
    %543 = vmatprep.subr.bf16.mxu0 %v419
    %544 = vmatpush1.bf16.msra.mxu0 %v418
    %545 = vmatprep.subr.bf16.mxu0 %v422
    %546 = vmatpush1.bf16.msra.mxu0 %v421
    %547 = vmatprep.subr.bf16.mxu0 0
    %548 = vmatpush1.bf16.msra.mxu0 0
    %549 = vmatprep.subr.bf16.mxu0 0
    %550 = vmatpush1.bf16.msra.mxu0 0
    %551 = vmatprep.subr.bf16.mxu0 0
    %552 = vmatpush1.bf16.msra.mxu0 0
    %553 = vmatprep.subr.bf16.mxu0 0
    %554 = vmatpush1.bf16.msra.mxu0 0
    %555 = vmatprep.subr.bf16.mxu0 0
    %556 = vmatpush1.bf16.msra.mxu0 0
    %557 = vmatprep.subr.bf16.mxu0 0
    %558 = vmatpush1.bf16.msra.mxu0 0
    %559 = vmatprep.subr.bf16.mxu0 0
    %560 = vmatpush1.bf16.msra.mxu0 0
    %561 = vmatprep.subr.bf16.mxu0 0
    %562 = vmatpush1.bf16.msra.mxu0 0
    %563 = vmatprep.subr.bf16.mxu0 0
    %564 = vmatpush1.bf16.msra.mxu0 0
    %565 = vmatprep.subr.bf16.mxu0 0
    %566 = vmatpush1.bf16.msra.mxu0 0
    %567 = vmatprep.subr.bf16.mxu0 0
    %568 = vmatpush1.bf16.msra.mxu0 0
    %569 = vmatprep.subr.bf16.mxu0 0
    %570 = vmatpush1.bf16.msra.mxu0 0
    %571 = vmatprep.subr.bf16.mxu0 0
    %572 = vmatpush1.bf16.msra.mxu0 0
    %573 = vmatprep.mubr.bf16.mxu0 0
    %574 = vmatmul.mubr.bf16.gmra.mrb[0].mxu0 %v483
    %v575 = vpop.f32.mrb[0].mxu0
    %v576 = vadd.f32 %v523, %v575
    %v577 = vpop.f32.mrb[0].mxu0
    %v578 = vadd.f32 %v525, %v577
    %v579 = vpop.f32.mrb[0].mxu0
    %v580 = vadd.f32 %v527, %v579
    %v581 = vpop.f32.mrb[0].mxu0
    %v582 = vadd.f32 %v529, %v581
    %583 = vmatprep.mubr.bf16.mxu0 0
    %584 = vmatmul.mubr.bf16.gmra.mrb[0].mxu0 %v486
    %v585 = vpop.f32.mrb[0].mxu0
    %v586 = vadd.f32 %v533, %v585
    %v587 = vpop.f32.mrb[0].mxu0
    %v588 = vadd.f32 %v535, %v587
    %v589 = vpop.f32.mrb[0].mxu0
    %v590 = vadd.f32 %v537, %v589
    %v591 = vpop.f32.mrb[0].mxu0
    %v592 = vadd.f32 %v539, %v591
    %593 = vdwg.mxu0
    %594 = vmatprep.subr.bf16.mxu0 0
    %595 = vmatpush1.bf16.msra.mxu0 %v369
    %596 = vmatprep.subr.bf16.mxu0 0
    %597 = vmatpush1.bf16.msra.mxu0 %v372
    %598 = vmatprep.subr.bf16.mxu0 0
    %599 = vmatpush1.bf16.msra.mxu0 %v375
    %600 = vmatprep.subr.bf16.mxu0 0
    %601 = vmatpush1.bf16.msra.mxu0 %v378
    %602 = vmatprep.subr.bf16.mxu0 0
    %603 = vmatpush1.bf16.msra.mxu0 %v381
    %604 = vmatprep.subr.bf16.mxu0 0
    %605 = vmatpush1.bf16.msra.mxu0 %v384
    %606 = vmatprep.subr.bf16.mxu0 0
    %607 = vmatpush1.bf16.msra.mxu0 %v387
    %608 = vmatprep.subr.bf16.mxu0 0
    %609 = vmatpush1.bf16.msra.mxu0 %v390
    %610 = vmatprep.subr.bf16.mxu0 0
    %611 = vmatpush1.bf16.msra.mxu0 %v393
    %612 = vmatprep.subr.bf16.mxu0 0
    %613 = vmatpush1.bf16.msra.mxu0 %v396
    %614 = vmatprep.subr.bf16.mxu0 0
    %615 = vmatpush1.bf16.msra.mxu0 %v399
    %616 = vmatprep.subr.bf16.mxu0 0
    %617 = vmatpush1.bf16.msra.mxu0 %v402
    %618 = vmatprep.subr.bf16.mxu0 0
    %619 = vmatpush1.bf16.msra.mxu0 %v405
    %620 = vmatprep.subr.bf16.mxu0 0
    %621 = vmatpush1.bf16.msra.mxu0 %v408
    %622 = vmatprep.subr.bf16.mxu0 0
    %623 = vmatpush1.bf16.msra.mxu0 %v411
    %624 = vmatprep.subr.bf16.mxu0 0
    %625 = vmatpush1.bf16.msra.mxu0 %v414
    %626 = vmatprep.mubr.bf16.mxu0 %v79
    %627 = vmatmul.mubr.bf16.gmra.mrb[0].mxu0 %v78
    %v628 = vpop.f32.mrb[0].mxu0
    %v629 = vadd.f32 %v173, %v628
    %v630 = vpop.f32.mrb[0].mxu0
    %v631 = vpop.f32.mrb[0].mxu0
    %v632 = vadd.f32 %v173, %v631
    %v633 = vpop.f32.mrb[0].mxu0
    %634 = vmatprep.mubr.bf16.mxu0 %v82
    %635 = vmatmul.mubr.bf16.gmra.mrb[0].mxu0 %v81
    %v636 = vpop.f32.mrb[0].mxu0
    %v637 = vadd.f32 %v173, %v636
    %v638 = vpop.f32.mrb[0].mxu0
    %v639 = vpop.f32.mrb[0].mxu0
    %v640 = vadd.f32 %v173, %v639
    %v641 = vpop.f32.mrb[0].mxu0
    %642 = vdwg.mxu0
    %643 = vmatprep.subr.bf16.mxu0 0
    %644 = vmatpush1.bf16.msra.mxu0 %v417
    %645 = vmatprep.subr.bf16.mxu0 0
    %646 = vmatpush1.bf16.msra.mxu0 %v420
    %647 = vmatprep.subr.bf16.mxu0 0
    %648 = vmatpush1.bf16.msra.mxu0 %v423
    %649 = vmatprep.subr.bf16.mxu0 0
    %650 = vmatpush1.bf16.msra.mxu0 0
    %651 = vmatprep.subr.bf16.mxu0 0
    %652 = vmatpush1.bf16.msra.mxu0 0
    %653 = vmatprep.subr.bf16.mxu0 0
    %654 = vmatpush1.bf16.msra.mxu0 0
    %655 = vmatprep.subr.bf16.mxu0 0
    %656 = vmatpush1.bf16.msra.mxu0 0
    %657 = vmatprep.subr.bf16.mxu0 0
    %658 = vmatpush1.bf16.msra.mxu0 0
    %659 = vmatprep.subr.bf16.mxu0 0
    %660 = vmatpush1.bf16.msra.mxu0 0
    %661 = vmatprep.subr.bf16.mxu0 0
    %662 = vmatpush1.bf16.msra.mxu0 0
    %663 = vmatprep.subr.bf16.mxu0 0
    %664 = vmatpush1.bf16.msra.mxu0 0
    %665 = vmatprep.subr.bf16.mxu0 0
    %666 = vmatpush1.bf16.msra.mxu0 0
    %667 = vmatprep.subr.bf16.mxu0 0
    %668 = vmatpush1.bf16.msra.mxu0 0
    %669 = vmatprep.subr.bf16.mxu0 0
    %670 = vmatpush1.bf16.msra.mxu0 0
    %671 = vmatprep.subr.bf16.mxu0 0
    %672 = vmatpush1.bf16.msra.mxu0 0
    %673 = vmatprep.subr.bf16.mxu0 0
    %674 = vmatpush1.bf16.msra.mxu0 0
    %675 = vmatprep.mubr.bf16.mxu0 0
    %676 = vmatmul.mubr.bf16.gmra.mrb[0].mxu0 %v483
    %v677 = vpop.f32.mrb[0].mxu0
    %v678 = vadd.f32 %v629, %v677
    %v679 = vpop.f32.mrb[0].mxu0
    %v680 = vpop.f32.mrb[0].mxu0
    %v681 = vadd.f32 %v632, %v680
    %v682 = vpop.f32.mrb[0].mxu0
    %683 = vmatprep.mubr.bf16.mxu0 0
    %684 = vmatmul.mubr.bf16.gmra.mrb[0].mxu0 %v486
    %v685 = vpop.f32.mrb[0].mxu0
    %v686 = vadd.f32 %v637, %v685
    %v687 = vpop.f32.mrb[0].mxu0
    %v688 = vpop.f32.mrb[0].mxu0
    %v689 = vadd.f32 %v640, %v688
    %v690 = vpop.f32.mrb[0].mxu0
    %691 = vdwg.mxu0
    %v692 = vmax.f32 %v576, 0.0
    %v693 = vmax.f32 %v578, 0.0
    %v694 = vmax.f32 %v678, 0.0
    %v695 = vmax.f32 %v580, 0.0
    %v696 = vmax.f32 %v582, 0.0
    %v697 = vmax.f32 %v681, 0.0
    %v698 = vmax.f32 %v586, 0.0
    %v699 = vmax.f32 %v588, 0.0
    %v700 = vmax.f32 %v686, 0.0
    %v701 = vmax.f32 %v590, 0.0
    %v702 = vmax.f32 %v592, 0.0
    %v703 = vmax.f32 %v689, 0.0
    %704 = vst [vmem:[#allocation8] sm:$0xff] %v692
    %705 = vst [vmem:[#allocation8 + $0x8] sm:$0xff] %v693
    %706 = vst [vmem:[#allocation8 + $0x10] sm:$0xff] %v694
    %707 = vst [vmem:[#allocation8 + $0x18] sm:$0xff] %v695
    %708 = vst [vmem:[#allocation8 + $0x20] sm:$0xff] %v696
    %709 = vst [vmem:[#allocation8 + $0x28] sm:$0xff] %v697
    %710 = vst [vmem:[#allocation8 + $0x30] sm:$0xff] %v698
    %711 = vst [vmem:[#allocation8 + $0x38] sm:$0xff] %v699
    %712 = vst [vmem:[#allocation8 + $0x40] sm:$0xff] %v700
    %713 = vst [vmem:[#allocation8 + $0x48] sm:$0xff] %v701
    %714 = vst [vmem:[#allocation8 + $0x50] sm:$0xff] %v702
    %715 = vst [vmem:[#allocation8 + $0x58] sm:$0xff] %v703
    %v716 = vld [vmem:[#allocation7] sm:$0xff]
    %v717 = vld [vmem:[#allocation7 + $0x8] sm:$0xf]
    %v718 = vld [vmem:[#allocation7 + $0xc] sm:$0xff]
    %v719 = vld [vmem:[#allocation7 + $0x14] sm:$0xf]
    %v720 = vld [vmem:[#allocation7 + $0x18] sm:$0xff]
    %v721 = vld [vmem:[#allocation7 + $0x20] sm:$0xf]
    %v722 = vld [vmem:[#allocation7 + $0x24] sm:$0xff]
    %v723 = vld [vmem:[#allocation7 + $0x2c] sm:$0xf]
    %v724 = vld [vmem:[#allocation7 + $0x30] sm:$0xff]
    %v725 = vld [vmem:[#allocation7 + $0x38] sm:$0xf]
    %v726 = vld [vmem:[#allocation7 + $0x3c] sm:$0xff]
    %v727 = vld [vmem:[#allocation7 + $0x44] sm:$0xf]
    %v728 = vld [vmem:[#allocation7 + $0x48] sm:$0xff]
    %v729 = vld [vmem:[#allocation7 + $0x50] sm:$0xf]
    %v730 = vld [vmem:[#allocation7 + $0x54] sm:$0xff]
    %v731 = vld [vmem:[#allocation7 + $0x5c] sm:$0xf]
    %v732 = vld [vmem:[#allocation7 + $0x60] sm:$0xff]
    %v733 = vld [vmem:[#allocation7 + $0x68] sm:$0xf]
    %v734 = vld [vmem:[#allocation7 + $0x6c] sm:$0xff]
    %v735 = vld [vmem:[#allocation7 + $0x74] sm:$0xf]
    %v736 = vld [vmem:[#allocation7 + $0x78] sm:$0xff]
    %v737 = vld [vmem:[#allocation7 + $0x80] sm:$0xf]
    %v738 = vld [vmem:[#allocation7 + $0x84] sm:$0xff]
    %v739 = vld [vmem:[#allocation7 + $0x8c] sm:$0xf]
    %v740 = vld [vmem:[#allocation7 + $0x90] sm:$0xff]
    %v741 = vld [vmem:[#allocation7 + $0x98] sm:$0xf]
    %v742 = vld [vmem:[#allocation7 + $0x9c] sm:$0xff]
    %v743 = vld [vmem:[#allocation7 + $0xa4] sm:$0xf]
    %v744 = vld [vmem:[#allocation7 + $0xa8] sm:$0xff]
    %v745 = vld [vmem:[#allocation7 + $0xb0] sm:$0xf]
    %v746 = vld [vmem:[#allocation7 + $0xb4] sm:$0xff]
    %v747 = vld [vmem:[#allocation7 + $0xbc] sm:$0xf]
    %v748 = vld [vmem:[#allocation7 + $0xc0] sm:$0xff]
    %v749 = vld [vmem:[#allocation7 + $0xc8] sm:$0xf]
    %v750 = vld [vmem:[#allocation7 + $0xcc] sm:$0xff]
    %v751 = vld [vmem:[#allocation7 + $0xd4] sm:$0xf]
    %v752 = vld [vmem:[#allocation7 + $0xd8] sm:$0xff]
    %v753 = vld [vmem:[#allocation7 + $0xe0] sm:$0xf]
    %v754 = vld [vmem:[#allocation7 + $0xe4] sm:$0xff]
    %v755 = vld [vmem:[#allocation7 + $0xec] sm:$0xf]
    %v756 = vld [vmem:[#allocation7 + $0xf0] sm:$0xff]
    %v757 = vld [vmem:[#allocation7 + $0xf8] sm:$0xf]
    %v758 = vld [vmem:[#allocation7 + $0xfc] sm:$0xff]
    %v759 = vld [vmem:[#allocation7 + $0x104] sm:$0xf]
    %v760 = vld [vmem:[#allocation7 + $0x108] sm:$0xff]
    %v761 = vld [vmem:[#allocation7 + $0x110] sm:$0xf]
    %v762 = vld [vmem:[#allocation7 + $0x114] sm:$0xff]
    %v763 = vld [vmem:[#allocation7 + $0x11c] sm:$0xf]
    %v764 = vld [vmem:[#allocation7 + $0x120] sm:$0xff]
    %v765 = vld [vmem:[#allocation7 + $0x128] sm:$0xf]
    %v766 = vld [vmem:[#allocation7 + $0x12c] sm:$0xff]
    %v767 = vld [vmem:[#allocation7 + $0x134] sm:$0xf]
    %v768 = vld [vmem:[#allocation7 + $0x138] sm:$0xff]
    %v769 = vld [vmem:[#allocation7 + $0x140] sm:$0xf]
    %v770 = vld [vmem:[#allocation7 + $0x144] sm:$0xff]
    %v771 = vld [vmem:[#allocation7 + $0x14c] sm:$0xf]
    %v772 = vld [vmem:[#allocation7 + $0x150] sm:$0xff]
    %v773 = vld [vmem:[#allocation7 + $0x158] sm:$0xf]
    %v774 = vld [vmem:[#allocation7 + $0x15c] sm:$0xff]
    %v775 = vld [vmem:[#allocation7 + $0x164] sm:$0xf]
    %v776 = vld [vmem:[#allocation7 + $0x168] sm:$0xff]
    %v777 = vld [vmem:[#allocation7 + $0x170] sm:$0xf]
    %v778 = vld [vmem:[#allocation7 + $0x174] sm:$0xff]
    %v779 = vld [vmem:[#allocation7 + $0x17c] sm:$0xf]
    %v780 = vld [vmem:[#allocation7 + $0x180] sm:$0xff]
    %v781 = vld [vmem:[#allocation7 + $0x188] sm:$0xf]
    %v782 = vld [vmem:[#allocation7 + $0x18c] sm:$0xff]
    %v783 = vld [vmem:[#allocation7 + $0x194] sm:$0xf]
    %v784 = vld [vmem:[#allocation7 + $0x198] sm:$0xff]
    %v785 = vld [vmem:[#allocation7 + $0x1a0] sm:$0xf]
    %v786 = vld [vmem:[#allocation7 + $0x1a4] sm:$0xff]
    %v787 = vld [vmem:[#allocation7 + $0x1ac] sm:$0xf]
    %v788 = vld [vmem:[#allocation7 + $0x1b0] sm:$0xff]
    %v789 = vld [vmem:[#allocation7 + $0x1b8] sm:$0xf]
    %v790 = vld [vmem:[#allocation7 + $0x1bc] sm:$0xff]
    %v791 = vld [vmem:[#allocation7 + $0x1c4] sm:$0xf]
    %v792 = vld [vmem:[%s4] sm:$0x7]
    %v794 = vlaneseq
    %v795 = vshrl.u32 %v794, 7
    %v796 = vsub.s32 0, %v795
    %v797 = vrot.slane %v792, %v796
    %v798 = vlaneseq
    %v799 = vshrl.u32 %v798, 7
    %v800 = vsub.s32 1, %v799
    %v801 = vrot.slane %v792, %v800
    %v802 = vlaneseq
    %v803 = vshrl.u32 %v802, 7
    %v804 = vsub.s32 2, %v803
    %v805 = vrot.slane %v792, %v804
    %v885 = vunpack.c.l.b16 %v716
    %v886 = vunpack.c.h.b16 %v716
    %v887 = vunpack.c.l.b16 %v717
    %v888 = vunpack.c.l.b16 %v718
    %v889 = vunpack.c.h.b16 %v718
    %v890 = vunpack.c.l.b16 %v719
    %v891 = vunpack.c.l.b16 %v720
    %v892 = vunpack.c.h.b16 %v720
    %v893 = vunpack.c.l.b16 %v721
    %v894 = vunpack.c.l.b16 %v722
    %v895 = vunpack.c.h.b16 %v722
    %v896 = vunpack.c.l.b16 %v723
    %v897 = vunpack.c.l.b16 %v724
    %v898 = vunpack.c.h.b16 %v724
    %v899 = vunpack.c.l.b16 %v725
    %v900 = vunpack.c.l.b16 %v726
    %v901 = vunpack.c.h.b16 %v726
    %v902 = vunpack.c.l.b16 %v727
    %v903 = vunpack.c.l.b16 %v728
    %v904 = vunpack.c.h.b16 %v728
    %v905 = vunpack.c.l.b16 %v729
    %v906 = vunpack.c.l.b16 %v730
    %v907 = vunpack.c.h.b16 %v730
    %v908 = vunpack.c.l.b16 %v731
    %v909 = vunpack.c.l.b16 %v732
    %v910 = vunpack.c.h.b16 %v732
    %v911 = vunpack.c.l.b16 %v733
    %v912 = vunpack.c.l.b16 %v734
    %v913 = vunpack.c.h.b16 %v734
    %v914 = vunpack.c.l.b16 %v735
    %v915 = vunpack.c.l.b16 %v736
    %v916 = vunpack.c.h.b16 %v736
    %v917 = vunpack.c.l.b16 %v737
    %v918 = vunpack.c.l.b16 %v738
    %v919 = vunpack.c.h.b16 %v738
    %v920 = vunpack.c.l.b16 %v739
    %v921 = vunpack.c.l.b16 %v740
    %v922 = vunpack.c.h.b16 %v740
    %v923 = vunpack.c.l.b16 %v741
    %v924 = vunpack.c.l.b16 %v742
    %v925 = vunpack.c.h.b16 %v742
    %v926 = vunpack.c.l.b16 %v743
    %v927 = vunpack.c.l.b16 %v744
    %v928 = vunpack.c.h.b16 %v744
    %v929 = vunpack.c.l.b16 %v745
    %v930 = vunpack.c.l.b16 %v746
    %v931 = vunpack.c.h.b16 %v746
    %v932 = vunpack.c.l.b16 %v747
    %v933 = vunpack.c.l.b16 %v748
    %v934 = vunpack.c.h.b16 %v748
    %v935 = vunpack.c.l.b16 %v749
    %v936 = vunpack.c.l.b16 %v750
    %v937 = vunpack.c.h.b16 %v750
    %v938 = vunpack.c.l.b16 %v751
    %v939 = vunpack.c.l.b16 %v752
    %v940 = vunpack.c.h.b16 %v752
    %v941 = vunpack.c.l.b16 %v753
    %v942 = vunpack.c.l.b16 %v754
    %v943 = vunpack.c.h.b16 %v754
    %v944 = vunpack.c.l.b16 %v755
    %v945 = vunpack.c.l.b16 %v756
    %v946 = vunpack.c.h.b16 %v756
    %v947 = vunpack.c.l.b16 %v757
    %v948 = vunpack.c.l.b16 %v758
    %v949 = vunpack.c.h.b16 %v758
    %v950 = vunpack.c.l.b16 %v759
    %v951 = vunpack.c.l.b16 %v760
    %v952 = vunpack.c.h.b16 %v760
    %v953 = vunpack.c.l.b16 %v761
    %v954 = vunpack.c.l.b16 %v762
    %v955 = vunpack.c.h.b16 %v762
    %v956 = vunpack.c.l.b16 %v763
    %v957 = vunpack.c.l.b16 %v764
    %v958 = vunpack.c.h.b16 %v764
    %v959 = vunpack.c.l.b16 %v765
    %v960 = vunpack.c.l.b16 %v766
    %v961 = vunpack.c.h.b16 %v766
    %v962 = vunpack.c.l.b16 %v767
    %v963 = vunpack.c.l.b16 %v768
    %v964 = vunpack.c.h.b16 %v768
    %v965 = vunpack.c.l.b16 %v769
    %v966 = vunpack.c.l.b16 %v770
    %v967 = vunpack.c.h.b16 %v770
    %v968 = vunpack.c.l.b16 %v771
    %v969 = vunpack.c.l.b16 %v772
    %v970 = vunpack.c.h.b16 %v772
    %v971 = vunpack.c.l.b16 %v773
    %v972 = vunpack.c.l.b16 %v774
    %v973 = vunpack.c.h.b16 %v774
    %v974 = vunpack.c.l.b16 %v775
    %v975 = vunpack.c.l.b16 %v776
    %v976 = vunpack.c.h.b16 %v776
    %v977 = vunpack.c.l.b16 %v777
    %v978 = vunpack.c.l.b16 %v778
    %v979 = vunpack.c.h.b16 %v778
    %v980 = vunpack.c.l.b16 %v779
    %v981 = vunpack.c.l.b16 %v780
    %v982 = vunpack.c.h.b16 %v780
    %v983 = vunpack.c.l.b16 %v781
    %v984 = vunpack.c.l.b16 %v782
    %v985 = vunpack.c.h.b16 %v782
    %v986 = vunpack.c.l.b16 %v783
    %v987 = vunpack.c.l.b16 %v784
    %v988 = vunpack.c.h.b16 %v784
    %v989 = vunpack.c.l.b16 %v785
    %v990 = vunpack.c.l.b16 %v786
    %v991 = vunpack.c.h.b16 %v786
    %v992 = vunpack.c.l.b16 %v787
    %v993 = vunpack.c.l.b16 %v788
    %v994 = vunpack.c.h.b16 %v788
    %v995 = vunpack.c.l.b16 %v789
    %v996 = vunpack.c.l.b16 %v790
    %v997 = vunpack.c.h.b16 %v790
    %v998 = vunpack.c.l.b16 %v791
    %v999 = vpack.c.b16 %v888, %v885
    %v1000 = vpack.c.b16 %v889, %v886
    %v1001 = vpack.c.b16 %v890, %v887
    %v1002 = vpack.c.b16 %v894, %v891
    %v1003 = vpack.c.b16 %v895, %v892
    %v1004 = vpack.c.b16 %v896, %v893
    %v1005 = vpack.c.b16 %v900, %v897
    %v1006 = vpack.c.b16 %v901, %v898
    %v1007 = vpack.c.b16 %v902, %v899
    %v1008 = vpack.c.b16 %v906, %v903
    %v1009 = vpack.c.b16 %v907, %v904
    %v1010 = vpack.c.b16 %v908, %v905
    %v1011 = vpack.c.b16 %v912, %v909
    %v1012 = vpack.c.b16 %v913, %v910
    %v1013 = vpack.c.b16 %v914, %v911
    %v1014 = vpack.c.b16 %v918, %v915
    %v1015 = vpack.c.b16 %v919, %v916
    %v1016 = vpack.c.b16 %v920, %v917
    %v1017 = vpack.c.b16 %v924, %v921
    %v1018 = vpack.c.b16 %v925, %v922
    %v1019 = vpack.c.b16 %v926, %v923
    %v1020 = vpack.c.b16 %v930, %v927
    %v1021 = vpack.c.b16 %v931, %v928
    %v1022 = vpack.c.b16 %v932, %v929
    %v1023 = vpack.c.b16 %v936, %v933
    %v1024 = vpack.c.b16 %v937, %v934
    %v1025 = vpack.c.b16 %v938, %v935
    %v1026 = vpack.c.b16 %v942, %v939
    %v1027 = vpack.c.b16 %v943, %v940
    %v1028 = vpack.c.b16 %v944, %v941
    %v1029 = vpack.c.b16 %v948, %v945
    %v1030 = vpack.c.b16 %v949, %v946
    %v1031 = vpack.c.b16 %v950, %v947
    %v1032 = vpack.c.b16 %v954, %v951
    %v1033 = vpack.c.b16 %v955, %v952
    %v1034 = vpack.c.b16 %v956, %v953
    %v1035 = vpack.c.b16 %v960, %v957
    %v1036 = vpack.c.b16 %v961, %v958
    %v1037 = vpack.c.b16 %v962, %v959
    %v1038 = vpack.c.b16 %v966, %v963
    %v1039 = vpack.c.b16 %v967, %v964
    %v1040 = vpack.c.b16 %v968, %v965
    %v1041 = vpack.c.b16 %v972, %v969
    %v1042 = vpack.c.b16 %v973, %v970
    %v1043 = vpack.c.b16 %v974, %v971
    %v1044 = vpack.c.b16 %v978, %v975
    %v1045 = vpack.c.b16 %v979, %v976
    %v1046 = vpack.c.b16 %v980, %v977
    %v1047 = vpack.c.b16 %v984, %v981
    %v1048 = vpack.c.b16 %v985, %v982
    %v1049 = vpack.c.b16 %v986, %v983
    %v1050 = vpack.c.b16 %v990, %v987
    %v1051 = vpack.c.b16 %v991, %v988
    %v1052 = vpack.c.b16 %v992, %v989
    %v1053 = vpack.c.b16 %v996, %v993
    %v1054 = vpack.c.b16 %v997, %v994
    %v1055 = vpack.c.b16 %v998, %v995
    %1113 = vmatprep.subr.bf16.mxu0 %v1000
    %1114 = vmatpush1.bf16.msra.mxu0 %v999
    %1115 = vmatprep.subr.bf16.mxu0 %v1003
    %1116 = vmatpush1.bf16.msra.mxu0 %v1002
    %1117 = vmatprep.subr.bf16.mxu0 %v1006
    %1118 = vmatpush1.bf16.msra.mxu0 %v1005
    %1119 = vmatprep.subr.bf16.mxu0 %v1009
    %1120 = vmatpush1.bf16.msra.mxu0 %v1008
    %1121 = vmatprep.subr.bf16.mxu0 %v1012
    %1122 = vmatpush1.bf16.msra.mxu0 %v1011
    %1123 = vmatprep.subr.bf16.mxu0 %v1015
    %1124 = vmatpush1.bf16.msra.mxu0 %v1014
    %1125 = vmatprep.subr.bf16.mxu0 %v1018
    %1126 = vmatpush1.bf16.msra.mxu0 %v1017
    %1127 = vmatprep.subr.bf16.mxu0 %v1021
    %1128 = vmatpush1.bf16.msra.mxu0 %v1020
    %1129 = vmatprep.subr.bf16.mxu0 %v1024
    %1130 = vmatpush1.bf16.msra.mxu0 %v1023
    %1131 = vmatprep.subr.bf16.mxu0 %v1027
    %1132 = vmatpush1.bf16.msra.mxu0 %v1026
    %1133 = vmatprep.subr.bf16.mxu0 %v1030
    %1134 = vmatpush1.bf16.msra.mxu0 %v1029
    %1135 = vmatprep.subr.bf16.mxu0 %v1033
    %1136 = vmatpush1.bf16.msra.mxu0 %v1032
    %1137 = vmatprep.subr.bf16.mxu0 %v1036
    %1138 = vmatpush1.bf16.msra.mxu0 %v1035
    %1139 = vmatprep.subr.bf16.mxu0 %v1039
    %1140 = vmatpush1.bf16.msra.mxu0 %v1038
    %1141 = vmatprep.subr.bf16.mxu0 %v1042
    %1142 = vmatpush1.bf16.msra.mxu0 %v1041
    %1143 = vmatprep.subr.bf16.mxu0 %v1045
    %1144 = vmatpush1.bf16.msra.mxu0 %v1044
    %1145 = vmatprep.mubr.bf16.mxu0 %v79
    %1146 = vmatmul.mubr.bf16.gmra.mrb[0].mxu0 %v78
    %v1147 = vpop.f32.mrb[0].mxu0
    %v1148 = vadd.f32 %v797, %v1147
    %v1149 = vpop.f32.mrb[0].mxu0
    %v1150 = vadd.f32 %v801, %v1149
    %v1151 = vpop.f32.mrb[0].mxu0
    %v1152 = vadd.f32 %v797, %v1151
    %v1153 = vpop.f32.mrb[0].mxu0
    %v1154 = vadd.f32 %v801, %v1153
    %1155 = vmatprep.mubr.bf16.mxu0 %v82
    %1156 = vmatmul.mubr.bf16.gmra.mrb[0].mxu0 %v81
    %v1157 = vpop.f32.mrb[0].mxu0
    %v1158 = vadd.f32 %v797, %v1157
    %v1159 = vpop.f32.mrb[0].mxu0
    %v1160 = vadd.f32 %v801, %v1159
    %v1161 = vpop.f32.mrb[0].mxu0
    %v1162 = vadd.f32 %v797, %v1161
    %v1163 = vpop.f32.mrb[0].mxu0
    %v1164 = vadd.f32 %v801, %v1163
    %1165 = vdwg.mxu0
    %1166 = vmatprep.subr.bf16.mxu0 %v1048
    %1167 = vmatpush1.bf16.msra.mxu0 %v1047
    %1168 = vmatprep.subr.bf16.mxu0 %v1051
    %1169 = vmatpush1.bf16.msra.mxu0 %v1050
    %1170 = vmatprep.subr.bf16.mxu0 %v1054
    %1171 = vmatpush1.bf16.msra.mxu0 %v1053
    %1172 = vmatprep.subr.bf16.mxu0 0
    %1173 = vmatpush1.bf16.msra.mxu0 0
    %1174 = vmatprep.subr.bf16.mxu0 0
    %1175 = vmatpush1.bf16.msra.mxu0 0
    %1176 = vmatprep.subr.bf16.mxu0 0
    %1177 = vmatpush1.bf16.msra.mxu0 0
    %1178 = vmatprep.subr.bf16.mxu0 0
    %1179 = vmatpush1.bf16.msra.mxu0 0
    %1180 = vmatprep.subr.bf16.mxu0 0
    %1181 = vmatpush1.bf16.msra.mxu0 0
    %1182 = vmatprep.subr.bf16.mxu0 0
    %1183 = vmatpush1.bf16.msra.mxu0 0
    %1184 = vmatprep.subr.bf16.mxu0 0
    %1185 = vmatpush1.bf16.msra.mxu0 0
    %1186 = vmatprep.subr.bf16.mxu0 0
    %1187 = vmatpush1.bf16.msra.mxu0 0
    %1188 = vmatprep.subr.bf16.mxu0 0
    %1189 = vmatpush1.bf16.msra.mxu0 0
    %1190 = vmatprep.subr.bf16.mxu0 0
    %1191 = vmatpush1.bf16.msra.mxu0 0
    %1192 = vmatprep.subr.bf16.mxu0 0
    %1193 = vmatpush1.bf16.msra.mxu0 0
    %1194 = vmatprep.subr.bf16.mxu0 0
    %1195 = vmatpush1.bf16.msra.mxu0 0
    %1196 = vmatprep.subr.bf16.mxu0 0
    %1197 = vmatpush1.bf16.msra.mxu0 0
    %1198 = vmatprep.mubr.bf16.mxu0 0
    %1199 = vmatmul.mubr.bf16.gmra.mrb[0].mxu0 %v483
    %v1200 = vpop.f32.mrb[0].mxu0
    %v1201 = vadd.f32 %v1148, %v1200
    %v1202 = vpop.f32.mrb[0].mxu0
    %v1203 = vadd.f32 %v1150, %v1202
    %v1204 = vpop.f32.mrb[0].mxu0
    %v1205 = vadd.f32 %v1152, %v1204
    %v1206 = vpop.f32.mrb[0].mxu0
    %v1207 = vadd.f32 %v1154, %v1206
    %1208 = vmatprep.mubr.bf16.mxu0 0
    %1209 = vmatmul.mubr.bf16.gmra.mrb[0].mxu0 %v486
    %v1210 = vpop.f32.mrb[0].mxu0
    %v1211 = vadd.f32 %v1158, %v1210
    %v1212 = vpop.f32.mrb[0].mxu0
    %v1213 = vadd.f32 %v1160, %v1212
    %v1214 = vpop.f32.mrb[0].mxu0
    %v1215 = vadd.f32 %v1162, %v1214
    %v1216 = vpop.f32.mrb[0].mxu0
    %v1217 = vadd.f32 %v1164, %v1216
    %1218 = vdwg.mxu0
    %1219 = vmatprep.subr.bf16.mxu0 0
    %1220 = vmatpush1.bf16.msra.mxu0 %v1001
    %1221 = vmatprep.subr.bf16.mxu0 0
    %1222 = vmatpush1.bf16.msra.mxu0 %v1004
    %1223 = vmatprep.subr.bf16.mxu0 0
    %1224 = vmatpush1.bf16.msra.mxu0 %v1007
    %1225 = vmatprep.subr.bf16.mxu0 0
    %1226 = vmatpush1.bf16.msra.mxu0 %v1010
    %1227 = vmatprep.subr.bf16.mxu0 0
    %1228 = vmatpush1.bf16.msra.mxu0 %v1013
    %1229 = vmatprep.subr.bf16.mxu0 0
    %1230 = vmatpush1.bf16.msra.mxu0 %v1016
    %1231 = vmatprep.subr.bf16.mxu0 0
    %1232 = vmatpush1.bf16.msra.mxu0 %v1019
    %1233 = vmatprep.subr.bf16.mxu0 0
    %1234 = vmatpush1.bf16.msra.mxu0 %v1022
    %1235 = vmatprep.subr.bf16.mxu0 0
    %1236 = vmatpush1.bf16.msra.mxu0 %v1025
    %1237 = vmatprep.subr.bf16.mxu0 0
    %1238 = vmatpush1.bf16.msra.mxu0 %v1028
    %1239 = vmatprep.subr.bf16.mxu0 0
    %1240 = vmatpush1.bf16.msra.mxu0 %v1031
    %1241 = vmatprep.subr.bf16.mxu0 0
    %1242 = vmatpush1.bf16.msra.mxu0 %v1034
    %1243 = vmatprep.subr.bf16.mxu0 0
    %1244 = vmatpush1.bf16.msra.mxu0 %v1037
    %1245 = vmatprep.subr.bf16.mxu0 0
    %1246 = vmatpush1.bf16.msra.mxu0 %v1040
    %1247 = vmatprep.subr.bf16.mxu0 0
    %1248 = vmatpush1.bf16.msra.mxu0 %v1043
    %1249 = vmatprep.subr.bf16.mxu0 0
    %1250 = vmatpush1.bf16.msra.mxu0 %v1046
    %1251 = vmatprep.mubr.bf16.mxu0 %v79
    %1252 = vmatmul.mubr.bf16.gmra.mrb[0].mxu0 %v78
    %v1253 = vpop.f32.mrb[0].mxu0
    %v1254 = vadd.f32 %v805, %v1253
    %v1255 = vpop.f32.mrb[0].mxu0
    %v1256 = vpop.f32.mrb[0].mxu0
    %v1257 = vadd.f32 %v805, %v1256
    %v1258 = vpop.f32.mrb[0].mxu0
    %1259 = vmatprep.mubr.bf16.mxu0 %v82
    %1260 = vmatmul.mubr.bf16.gmra.mrb[0].mxu0 %v81
    %v1261 = vpop.f32.mrb[0].mxu0
    %v1262 = vadd.f32 %v805, %v1261
    %v1263 = vpop.f32.mrb[0].mxu0
    %v1264 = vpop.f32.mrb[0].mxu0
    %v1265 = vadd.f32 %v805, %v1264
    %v1266 = vpop.f32.mrb[0].mxu0
    %1267 = vdwg.mxu0
    %1268 = vmatprep.subr.bf16.mxu0 0
    %1269 = vmatpush1.bf16.msra.mxu0 %v1049
    %1270 = vmatprep.subr.bf16.mxu0 0
    %1271 = vmatpush1.bf16.msra.mxu0 %v1052
    %1272 = vmatprep.subr.bf16.mxu0 0
    %1273 = vmatpush1.bf16.msra.mxu0 %v1055
    %1274 = vmatprep.subr.bf16.mxu0 0
    %1275 = vmatpush1.bf16.msra.mxu0 0
    %1276 = vmatprep.subr.bf16.mxu0 0
    %1277 = vmatpush1.bf16.msra.mxu0 0
    %1278 = vmatprep.subr.bf16.mxu0 0
    %1279 = vmatpush1.bf16.msra.mxu0 0
    %1280 = vmatprep.subr.bf16.mxu0 0
    %1281 = vmatpush1.bf16.msra.mxu0 0
    %1282 = vmatprep.subr.bf16.mxu0 0
    %1283 = vmatpush1.bf16.msra.mxu0 0
    %1284 = vmatprep.subr.bf16.mxu0 0
    %1285 = vmatpush1.bf16.msra.mxu0 0
    %1286 = vmatprep.subr.bf16.mxu0 0
    %1287 = vmatpush1.bf16.msra.mxu0 0
    %1288 = vmatprep.subr.bf16.mxu0 0
    %1289 = vmatpush1.bf16.msra.mxu0 0
    %1290 = vmatprep.subr.bf16.mxu0 0
    %1291 = vmatpush1.bf16.msra.mxu0 0
    %1292 = vmatprep.subr.bf16.mxu0 0
    %1293 = vmatpush1.bf16.msra.mxu0 0
    %1294 = vmatprep.subr.bf16.mxu0 0
    %1295 = vmatpush1.bf16.msra.mxu0 0
    %1296 = vmatprep.subr.bf16.mxu0 0
    %1297 = vmatpush1.bf16.msra.mxu0 0
    %1298 = vmatprep.subr.bf16.mxu0 0
    %1299 = vmatpush1.bf16.msra.mxu0 0
    %1300 = vmatprep.mubr.bf16.mxu0 0
    %1301 = vmatmul.mubr.bf16.gmra.mrb[0].mxu0 %v483
    %v1302 = vpop.f32.mrb[0].mxu0
    %v1303 = vadd.f32 %v1254, %v1302
    %v1304 = vpop.f32.mrb[0].mxu0
    %v1305 = vpop.f32.mrb[0].mxu0
    %v1306 = vadd.f32 %v1257, %v1305
    %v1307 = vpop.f32.mrb[0].mxu0
    %1308 = vmatprep.mubr.bf16.mxu0 0
    %1309 = vmatmul.mubr.bf16.gmra.mrb[0].mxu0 %v486
    %v1310 = vpop.f32.mrb[0].mxu0
    %v1311 = vadd.f32 %v1262, %v1310
    %v1312 = vpop.f32.mrb[0].mxu0
    %v1313 = vpop.f32.mrb[0].mxu0
    %v1314 = vadd.f32 %v1265, %v1313
    %v1315 = vpop.f32.mrb[0].mxu0
    %1316 = vdwg.mxu0
    %v1317 = vmax.f32 %v1201, 0.0
    %v1318 = vmax.f32 %v1203, 0.0
    %v1319 = vmax.f32 %v1303, 0.0
    %v1320 = vmax.f32 %v1205, 0.0
    %v1321 = vmax.f32 %v1207, 0.0
    %v1322 = vmax.f32 %v1306, 0.0
    %v1323 = vmax.f32 %v1211, 0.0
    %v1324 = vmax.f32 %v1213, 0.0
    %v1325 = vmax.f32 %v1311, 0.0
    %v1326 = vmax.f32 %v1215, 0.0
    %v1327 = vmax.f32 %v1217, 0.0
    %v1328 = vmax.f32 %v1314, 0.0
    %1329 = vst [vmem:[#allocation9] sm:$0xff] %v1317
    %1330 = vst [vmem:[#allocation9 + $0x8] sm:$0xff] %v1318
    %1331 = vst [vmem:[#allocation9 + $0x10] sm:$0xff] %v1319
    %1332 = vst [vmem:[#allocation9 + $0x18] sm:$0xff] %v1320
    %1333 = vst [vmem:[#allocation9 + $0x20] sm:$0xff] %v1321
    %1334 = vst [vmem:[#allocation9 + $0x28] sm:$0xff] %v1322
    %1335 = vst [vmem:[#allocation9 + $0x30] sm:$0xff] %v1323
    %1336 = vst [vmem:[#allocation9 + $0x38] sm:$0xff] %v1324
    %1337 = vst [vmem:[#allocation9 + $0x40] sm:$0xff] %v1325
    %1338 = vst [vmem:[#allocation9 + $0x48] sm:$0xff] %v1326
    %1339 = vst [vmem:[#allocation9 + $0x50] sm:$0xff] %v1327
    %1340 = vst [vmem:[#allocation9 + $0x58] sm:$0xff] %v1328
    // Predicated region
    $region34: #{tpu_custom_call.1} parent=1 // pred_check
      _
    $region35: #{tpu_custom_call.1} parent=1 // pred_check_branch
      %1342 = sbr.rel (0) target = $region37
    $region36: #{tpu_custom_call.1} parent=1 // pred_region
      %s1344 = ssub.s32 1536, 1536
      %1345 = vsyncadd [#allocation4], %s1344
      %s1346 = sshll.u32 [#allocation8], 4
      %s1347 = int_to_ptr.vmem [resolvable:$true] %s1346
      %1352 = dma.vmem_to_hbm [thread:$0]  %s1347, 1536, %s5, [#allocation4], 384, 384, 24
    $region37: #{tpu_custom_call.1} parent=1 // pred_fallthru
      _
    // Predicated region
    $region38: #{tpu_custom_call.1} parent=1 // pred_check
      _
    $region39: #{tpu_custom_call.1} parent=1 // pred_check_branch
      %1354 = sbr.rel (0) target = $region41
    $region40: #{tpu_custom_call.1} parent=1 // pred_region
      %s1356 = ssub.s32 1536, 1536
      %1357 = vsyncadd [#allocation10], %s1356
      %s1358 = sshll.u32 [#allocation9], 4
      %s1359 = int_to_ptr.vmem [resolvable:$true] %s1358
      %1364 = dma.vmem_to_hbm [thread:$0]  %s1359, 1536, %s6, [#allocation10], 384, 384, 24
    $region41: #{tpu_custom_call.1} parent=1 // pred_fallthru
      _
    // Predicated region
    $region42: #{tpu_custom_call.1} parent=1 // pred_check
      _
    $region43: #{tpu_custom_call.1} parent=1 // pred_check_branch
      %1366 = sbr.rel (0) target = $region45
    $region44: #{tpu_custom_call.1} parent=1 // pred_region
      %1367 = dma.done [#allocation4], 1536
    $region45: #{tpu_custom_call.1} parent=1 // pred_fallthru
      _
    // Predicated region
    $region46: #{tpu_custom_call.1} parent=1 // pred_check
      _
    $region47: #{tpu_custom_call.1} parent=1 // pred_check_branch
      %1369 = sbr.rel (0) target = $region49
    $region48: #{tpu_custom_call.1} parent=1 // pred_region
      %1370 = dma.done [#allocation10], 1536
    $region49: #{tpu_custom_call.1} parent=1 // pred_fallthru
      _
    %1371 = vsyncpa [#allocation3], 1
    %1372 = vsyncpa [#allocation6], 1
    %1373 = vsyncpa [#allocation4], 1
    %1374 = vsyncpa [#allocation10], 1

</llo_original>
